<compile_context>
chip_gen: v7x
topology: tpu7x:2x2x1
jax: 0.10.0
libtpu: 0.0.40
codegen_flags: <defaults>
</compile_context>

<pallas_src>
import math
import functools

import numpy as np
import jax
import jax.numpy as jnp
from jax.experimental import pallas as pl
from jax.experimental.pallas import tpu as pltpu


_LANE = 128


def _round_up(n, m):
    return ((n + m - 1) // m) * m


# SH lighting constants (set_Illu_consts)
_A0 = math.pi
_A1 = 2.0 * math.pi / math.sqrt(3.0)
_A2 = 2.0 * math.pi / math.sqrt(8.0)
_C0 = 1.0 / math.sqrt(4.0 * math.pi)
_C1 = math.sqrt(3.0) / math.sqrt(4.0 * math.pi)
_C2 = 3.0 * math.sqrt(5.0) / math.sqrt(12.0 * math.pi)
_D0 = 0.5 / math.sqrt(3.0)


# ---------------------------------------------------------------------------
# Kernel 1: get_Landmarks — Shape.bmm(K^T); divide by z     (lane-dense [B,3,Np])
# ---------------------------------------------------------------------------
def _landmarks_kernel(fx, fy, cx, cy, v_ref, out_ref):
    x = v_ref[:, 0:1, :]                     # (B, 1, Np) — full-lane rows
    y = v_ref[:, 1:2, :]
    z = v_ref[:, 2:3, :]
    inv_z = 1.0 / z                          # exact divide (torch parity, 1e-4 check)
    px = (fx * x + cx * z) * inv_z
    py = (fy * y + cy * z) * inv_z
    out_ref[...] = jnp.concatenate([px, py], axis=1)   # single unmasked full-tile store


# ---------------------------------------------------------------------------
# Kernel 2: fused Compute_norm + Illumination_layer
#   inputs : v1,v2,v3 (B,3,Fp) pre-gathered face vertices, adjM (Fp,Np) one-hot
#            adjacency counts, albedo (B,3,Np), gamma (B,27) in SMEM
#   outputs: face_color (B,3,Np), lighting (B,3,Np)
# ---------------------------------------------------------------------------
def _illum_fused_kernel(v1_ref, v2_ref, v3_ref, adj_ref, alb_ref, g_ref,
                        color_ref, light_ref):
    B = alb_ref.shape[0]

    # ---- face normals (cross product), all batches stacked along sublanes ----
    rows = []
    for b in range(B):
        e1 = v1_ref[b] - v2_ref[b]                        # (3, Fp)
        e2 = v2_ref[b] - v3_ref[b]
        a0, a1, a2 = e1[0:1, :], e1[1:2, :], e1[2:3, :]
        b0, b1, b2 = e2[0:1, :], e2[1:2, :], e2[2:3, :]
        rows += [a1 * b2 - a2 * b1,
                 a2 * b0 - a0 * b2,
                 a0 * b1 - a1 * b0]
    n_rows = 3 * B
    rows += [jnp.zeros_like(rows[0])] * ((-n_rows) % 8)   # sublane-align MXU lhs
    fn = jnp.concatenate(rows, axis=0)                    # (n_rows_pad, Fp)

    # ---- adjacency sum as a small one-hot matmul on the (otherwise idle) MXU.
    #      Split-f32 (bf16 hi/lo parts) keeps full f32 accuracy no matter how the
    #      MXU decomposes f32 operands. ----
    adjM = adj_ref[...]                                   # (Fp, Np), counts {0,1,2,...}
    fn_hi = fn.astype(jnp.bfloat16).astype(jnp.float32)
    fn_lo = fn - fn_hi
    vr = (jnp.dot(fn_hi, adjM, preferred_element_type=jnp.float32)
          + jnp.dot(fn_lo, adjM, preferred_element_type=jnp.float32))   # (n_rows_pad, Np)

    # ---- per-batch: normalize + SH lighting (scalar gamma from SMEM) + albedo ----
    for b in range(B):
        vx = vr[3 * b + 0:3 * b + 1, :]                   # (1, Np)
        vy = vr[3 * b + 1:3 * b + 2, :]
        vz = vr[3 * b + 2:3 * b + 3, :]
        inv = 1.0 / (jnp.sqrt(vx * vx + vy * vy + vz * vz) + 1e-8)
        nx, ny, nz = vx * inv, vy * inv, vz * inv
        ones = jnp.ones_like(nx)
        Y = [ones * (_A0 * _C0),
             (-_A1 * _C1) * ny,
             (_A1 * _C1) * nz,
             (-_A1 * _C1) * nx,
             (_A2 * _C2) * nx * ny,
             (-_A2 * _C2) * ny * nz,
             (_A2 * _C2 * _D0) * (3.0 * nz * nz - 1.0),
             (-_A2 * _C2) * nx * nz,
             (_A2 * _C2 * 0.5) * (nx * nx - ny * ny)]
        chans = []
        for c in range(3):                                # Y.bmm(gamma): 27 scalar FMAs
            acc = Y[0] * g_ref[b, c]
            for k in range(1, 9):
                acc = acc + Y[k] * g_ref[b, 3 * k + c]
            chans.append(acc)
        light_b = jnp.concatenate(chans, axis=0)          # (3, Np)
        light_ref[b] = light_b                            # one full-tile store each
        color_ref[b] = light_b * alb_ref[b]


# ---------------------------------------------------------------------------
# Wrapper "module"
# ---------------------------------------------------------------------------
class ManoRenderPallas:
    def __init__(self, input_res=64, batch_size=2):
        self.input_res = input_res
        self.B = batch_size
        fx = 512.0
        fy = 512.0
        cx = input_res / 2.0
        cy = input_res / 2.0
        self.f = fx
        self.cx, self.cy = cx, cy
        self.K = jnp.array([[fx, 0.0, cx], [0.0, fy, cy], [0.0, 0.0, 1.0]],
                           dtype=jnp.float32)[None]           # (1, 3, 3)
        self.inv_K = jnp.linalg.inv(self.K[0])[None]
        weight = np.array([20, 20, 1, 1, 1, 1, 1, 1, 20, 20, 1, 1, 1, 1, 1, 1,
                           20, 20, 1, 1, 1, 1, 1, 1, 20, 20, 1, 1, 1, 1, 1, 1,
                           20, 20, 1, 1, 1, 1, 1, 1, 20, 20], dtype=np.float32)
        self.weighted_lms = jnp.asarray(weight.reshape([1, 1, 42]))
        self.illu_consts = [_A0, _A1, _A2, _C0, _C1, _C2, _D0]

    # ---- get_Landmarks ---------------------------------------------------
    def get_landmarks(self, shape):
        B, N, _ = shape.shape
        Np = max(_LANE, _round_up(N, _LANE))
        # wrapper-side layout plumbing: channel-major, lane-dense, edge-padded (keeps z>0)
        v = jnp.transpose(shape, (0, 2, 1))                   # (B, 3, N)
        v = jnp.pad(v, ((0, 0), (0, 0), (0, Np - N)), mode='edge')
        kern = functools.partial(_landmarks_kernel, self.f, self.f, self.cx, self.cy)
        out = pl.pallas_call(
            kern,
            out_shape=jax.ShapeDtypeStruct((B, 2, Np), jnp.float32),
            grid=(1,),
            in_specs=[pl.BlockSpec((B, 3, Np), lambda i: (0, 0, 0))],
            out_specs=pl.BlockSpec((B, 2, Np), lambda i: (0, 0, 0)),
        )(v)
        return jnp.transpose(out[:, :, :N], (0, 2, 1))        # (B, N, 2)

    # ---- Illumination = Compute_norm + Illumination_layer ----------------
    def illumination(self, albedo, cano_shape, gamma, faces, adj_faces):
        B, N, _ = albedo.shape
        F = faces.shape[0]
        Np = max(_LANE, _round_up(N, _LANE))
        Fp = max(_LANE, _round_up(F, _LANE))

        # glue: lane-dense transpose + face-vertex gather (data-dependent indexing)
        cs = jnp.transpose(cano_shape, (0, 2, 1))             # (B, 3, N)
        padF = ((0, 0), (0, 0), (0, Fp - F))
        v1 = jnp.pad(cs[:, :, faces[:, 0]], padF)             # (B, 3, Fp)
        v2 = jnp.pad(cs[:, :, faces[:, 1]], padF)
        v3 = jnp.pad(cs[:, :, faces[:, 2]], padF)
        alb = jnp.pad(jnp.transpose(albedo, (0, 2, 1)),
                      ((0, 0), (0, 0), (0, Np - N)))          # (B, 3, Np)

        # adjacency count matrix (Fp, Np); entries equal to F (the "empty" face) drop
        # out, which matches the appended zero row in the reference implementation.
        onehot = (adj_faces[:, :, None] ==
                  jnp.arange(F, dtype=adj_faces.dtype)[None, None, :])   # (N, A, F)
        adjM = jnp.pad(onehot.sum(axis=1).astype(jnp.float32).T,
                       ((0, Fp - F), (0, Np - N)))            # (Fp, Np)

        # gamma prep (glue): view(-1,3,9), +0.8 on band 0, permute -> (B,9,3), flatten
        g = gamma.reshape(B, 3, 9)
        g = g.at[:, :, 0].add(0.8)
        g = jnp.transpose(g, (0, 2, 1)).reshape(B, 27)        # index = 3*k + c

        color, light = pl.pallas_call(
            _illum_fused_kernel,
            out_shape=(jax.ShapeDtypeStruct((B, 3, Np), jnp.float32),
                       jax.ShapeDtypeStruct((B, 3, Np), jnp.float32)),
            grid=(1,),
            in_specs=[pl.BlockSpec((B, 3, Fp), lambda i: (0, 0, 0)),
                      pl.BlockSpec((B, 3, Fp), lambda i: (0, 0, 0)),
                      pl.BlockSpec((B, 3, Fp), lambda i: (0, 0, 0)),
                      pl.BlockSpec((Fp, Np), lambda i: (0, 0)),
                      pl.BlockSpec((B, 3, Np), lambda i: (0, 0, 0)),
                      pl.BlockSpec(memory_space=pltpu.MemorySpace.SMEM)],
            out_specs=(pl.BlockSpec((B, 3, Np), lambda i: (0, 0, 0)),
                       pl.BlockSpec((B, 3, Np), lambda i: (0, 0, 0))),
        )(v1, v2, v3, adjM, alb, g)

        face_color = jnp.transpose(color[:, :, :N], (0, 2, 1))
        lighting = jnp.transpose(light[:, :, :N], (0, 2, 1))
        return face_color, lighting


# ---------------------------------------------------------------------------
# Pure-JAX references for verification
# ---------------------------------------------------------------------------
def _ref_landmarks(shape, K):
    proj = jnp.einsum('bnk,jk->bnj', shape, K)
    return proj[..., :2] / proj[..., 2:3]


def _ref_illumination(albedo, cano, gamma, faces, adj):
    B = cano.shape[0]
    v1 = cano[:, faces[:, 0], :]
    v2 = cano[:, faces[:, 1], :]
    v3 = cano[:, faces[:, 2], :]
    fn = jnp.cross(v1 - v2, v2 - v3)
    fn = jnp.concatenate([fn, jnp.zeros((B, 1, 3), fn.dtype)], axis=1)
    vn = fn[:, adj, :].sum(axis=2)
    vn = vn / (jnp.linalg.norm(vn, axis=2, keepdims=True) + 1e-8)
    g = gamma.reshape(B, 3, 9)
    g = g.at[:, :, 0].add(0.8)
    g = jnp.transpose(g, (0, 2, 1))
    nx, ny, nz = vn[..., 0], vn[..., 1], vn[..., 2]
    ones = jnp.ones_like(nx)
    Y = jnp.stack([ones * _A0 * _C0, -_A1 * _C1 * ny, _A1 * _C1 * nz, -_A1 * _C1 * nx,
                   _A2 * _C2 * nx * ny, -_A2 * _C2 * ny * nz,
                   _A2 * _C2 * _D0 * (3.0 * nz ** 2 - 1.0),
                   -_A2 * _C2 * nx * nz, _A2 * _C2 * 0.5 * (nx ** 2 - ny ** 2)], axis=-1)
    lighting = jnp.einsum('bnk,bkc->bnc', Y, g)
    return albedo * lighting, lighting


if __name__ == "__main__":
    key = jax.random.PRNGKey(0)
    B, N, F, A = 2, 64, 96, 4           # batch, vertices, faces, adjacency degree
    input_res = 64

    render = ManoRenderPallas(input_res=input_res, batch_size=B)

    k1, k2, k3, k4, k5, k6 = jax.random.split(key, 6)
    cano_shape = jax.random.normal(k1, (B, N, 3), dtype=jnp.float32)
    albedo = jax.random.uniform(k2, (B, N, 3), dtype=jnp.float32)
    gamma = 0.1 * jax.random.normal(k3, (B, 27), dtype=jnp.float32)
    faces = jax.random.randint(k4, (F, 3), 0, N, dtype=jnp.int32)
    adj_faces = jax.random.randint(k5, (N, A), 0, F + 1, dtype=jnp.int32)
    verts = jax.random.normal(k6, (B, N, 3), dtype=jnp.float32)
    verts = verts.at[..., 2].add(3.0)   # positive depth for projection

    # Landmarks (perspective projection with intrinsics K)
    lms = render.get_landmarks(verts)
    jax.block_until_ready(lms)
    lms_ref = _ref_landmarks(verts, render.K[0])
    np.testing.assert_allclose(np.asarray(lms), np.asarray(lms_ref), rtol=1e-4, atol=1e-4)

    # Illumination (vertex normals + SH lighting + albedo modulation), fully fused
    face_color, lighting = render.illumination(albedo, cano_shape, gamma, faces, adj_faces)
    jax.block_until_ready(face_color)
    jax.block_until_ready(lighting)
    fc_ref, li_ref = _ref_illumination(albedo, cano_shape, gamma, faces, adj_faces)
    np.testing.assert_allclose(np.asarray(lighting), np.asarray(li_ref), rtol=1e-4, atol=1e-5)
    np.testing.assert_allclose(np.asarray(face_color), np.asarray(fc_ref), rtol=1e-4, atol=1e-5)

    print("KERNEL_OK")
</pallas_src>

<mosaic_0001>
module attributes {stable_mosaic.version = 11 : i64} {
  func.func @_landmarks_kernel(%arg0: i32, %arg1: memref<2x3x128xf32, #tpu.memory_space<vmem>>, %arg2: memref<2x2x128xf32, #tpu.memory_space<vmem>>) attributes {dimension_semantics = [#tpu.dimension_semantics<arbitrary>], iteration_bounds = array<i64: 1>, scalar_prefetch = 0 : i64, scratch_operands = 0 : i64, tpu.core_type = #tpu.core_type<tc>, window_params = [{pipeline_mode = #tpu.pipeline_mode<synchronous>, transform_indices = @transform_0, window_bounds = array<i64: 2, 3, 128>}, {pipeline_mode = #tpu.pipeline_mode<synchronous>, transform_indices = @transform_1, window_bounds = array<i64: 2, 2, 128>}]} {
    %c0 = arith.constant 0 : index
    %c0_0 = arith.constant 0 : index
    %c0_1 = arith.constant 0 : index
    %0 = vector.load %arg1[%c0, %c0_0, %c0_1] : memref<2x3x128xf32, #tpu.memory_space<vmem>>, vector<2x1x128xf32>
    %c0_2 = arith.constant 0 : index
    %c1 = arith.constant 1 : index
    %c0_3 = arith.constant 0 : index
    %1 = vector.load %arg1[%c0_2, %c1, %c0_3] : memref<2x3x128xf32, #tpu.memory_space<vmem>>, vector<2x1x128xf32>
    %c0_4 = arith.constant 0 : index
    %c2 = arith.constant 2 : index
    %c0_5 = arith.constant 0 : index
    %2 = vector.load %arg1[%c0_4, %c2, %c0_5] : memref<2x3x128xf32, #tpu.memory_space<vmem>>, vector<2x1x128xf32>
    %cst = arith.constant 1.000000e+00 : f32
    %3 = vector.broadcast %cst : f32 to vector<2x1x128xf32>
    %4 = arith.divf %3, %2 : vector<2x1x128xf32>
    %cst_6 = arith.constant 5.120000e+02 : f32
    %5 = vector.broadcast %cst_6 : f32 to vector<2x1x128xf32>
    %6 = arith.mulf %5, %0 : vector<2x1x128xf32>
    %cst_7 = arith.constant 3.200000e+01 : f32
    %7 = vector.broadcast %cst_7 : f32 to vector<2x1x128xf32>
    %8 = arith.mulf %7, %2 : vector<2x1x128xf32>
    %9 = arith.addf %6, %8 : vector<2x1x128xf32>
    %10 = arith.mulf %9, %4 : vector<2x1x128xf32>
    %cst_8 = arith.constant 5.120000e+02 : f32
    %11 = vector.broadcast %cst_8 : f32 to vector<2x1x128xf32>
    %12 = arith.mulf %11, %1 : vector<2x1x128xf32>
    %cst_9 = arith.constant 3.200000e+01 : f32
    %13 = vector.broadcast %cst_9 : f32 to vector<2x1x128xf32>
    %14 = arith.mulf %13, %2 : vector<2x1x128xf32>
    %15 = arith.addf %12, %14 : vector<2x1x128xf32>
    %16 = arith.mulf %15, %4 : vector<2x1x128xf32>
    %17 = tpu.concatenate %10, %16 in 1 : vector<2x1x128xf32>, vector<2x1x128xf32> -> vector<2x2x128xf32>
    %c0_10 = arith.constant 0 : index
    %c0_11 = arith.constant 0 : index
    %c0_12 = arith.constant 0 : index
    %18 = vector.load %arg2[%c0_10, %c0_11, %c0_12] : memref<2x2x128xf32, #tpu.memory_space<vmem>>, vector<2x2x128xf32>
    tpu.vector_store %arg2[%c0_10, %c0_11, %c0_12], %17 {strides = array<i32>} : memref<2x2x128xf32, #tpu.memory_space<vmem>>, vector<2x2x128xf32>,
    return
  }
  func.func @transform_0(%arg0: i32) -> (i32, i32, i32) {
    %c0_i32 = arith.constant 0 : i32
    %c0_i32_0 = arith.constant 0 : i32
    %c0_i32_1 = arith.constant 0 : i32
    %c0_i32_2 = arith.constant 0 : i32
    return %c0_i32, %c0_i32_0, %c0_i32_1 : i32, i32, i32
  }
  func.func @transform_1(%arg0: i32) -> (i32, i32, i32) {
    %c0_i32 = arith.constant 0 : i32
    %c0_i32_0 = arith.constant 0 : i32
    %c0_i32_1 = arith.constant 0 : i32
    %c0_i32_2 = arith.constant 0 : i32
    return %c0_i32, %c0_i32_0, %c0_i32_1 : i32, i32, i32
  }
}

</mosaic_0001>

<llo_original>
// kernel: tpu_custom_call.1
$region0: #{tpu_custom_call.1}
  #allocation0 [shape = 'u32[]', space=smem, size = 0x4, offset = 0x4, fixed_abs, tag = 'smem constant byte address 0x4 - core index']
  #allocation1 [shape = 'u32[144,128]{1,0:T(1,128)}', space=vmem, size = 0x12000, scoped, tag = 'internal scratch']
  %s0 = inlined_call_operand.vmem [shape: f32[2,3,128], index: 0, kind: input, shape index: {}]
  %s1 = inlined_call_operand.hbm [shape: f32[2,2,128], index: 1, kind: output, shape index: {}]
  %s2 = sld [smem:[#allocation0]]
  $region14: #{tpu_custom_call.1} parent=0
    _
  %s4 = ssub.s32 1, %s2
  %s5 = scalar_select 0, %s4, %s2
  $region1: #{tpu_custom_call.1} parent=0
    #allocation2 [shape = 'u8[2048]{0}', space=vmem, size = 0x800, scoped, tag = 'output window, operand 0, single buffered']
    #allocation3 [shape = 's32[1]{0}', space=sflag, size = 0x4, scoped, tag = 'scoped memory for tpu_custom_call.1']
    %6 = vsyncpa [#allocation3], 0
    // Predicated region
    $region2: #{tpu_custom_call.1} parent=1 // pred_check
      _
    $region3: #{tpu_custom_call.1} parent=1 // pred_check_branch
      %8 = sbr.rel (0) target = $region5
    $region4: #{tpu_custom_call.1} parent=1 // pred_region
      _
    $region5: #{tpu_custom_call.1} parent=1 // pred_fallthru
      _
    %v9 = vld [vmem:[%s0] sm:$0x1]
    %v10 = vld [vmem:[%s0 + $0x4] sm:$0x1]
    %v11 = vld [vmem:[%s0 + $0x1] sm:$0x1]
    %v12 = vld [vmem:[%s0 + $0x5] sm:$0x1]
    %v13 = vld [vmem:[%s0 + $0x2] sm:$0x1]
    %v14 = vld [vmem:[%s0 + $0x6] sm:$0x1]
    %v15 = vrcp.pop %v13
    %v16 = vmul.f32 1.0, %v15
    %v17 = vrcp.pop %v14
    %v18 = vmul.f32 1.0, %v17
    %v19 = vmul.f32 %v9, 512.0
    %v20 = vmul.f32 %v10, 512.0
    %v21 = vmul.f32 %v13, 32.0
    %v22 = vmul.f32 %v14, 32.0
    %v23 = vadd.f32 %v19, %v21
    %v24 = vadd.f32 %v20, %v22
    %v25 = vmul.f32 %v23, %v16
    %v26 = vmul.f32 %v24, %v18
    %v27 = vmul.f32 %v11, 512.0
    %v28 = vmul.f32 %v12, 512.0
    %v29 = vadd.f32 %v27, %v21
    %v30 = vadd.f32 %v28, %v22
    %v31 = vmul.f32 %v29, %v16
    %v32 = vmul.f32 %v30, %v18
    %v35 = vrot.slane %v31, 7
    %v36 = vrot.slane %v32, 7
    %vm39 = vcmask 1040384
    %v40 = vsel %vm39, %v25, %v35
    %v41 = vsel %vm39, %v26, %v36
    %42 = vst [vmem:[#allocation2] sm:$0x3] %v40
    %43 = vst [vmem:[#allocation2 + $0x2] sm:$0x3] %v41
    // Predicated region
    $region6: #{tpu_custom_call.1} parent=1 // pred_check
      _
    $region7: #{tpu_custom_call.1} parent=1 // pred_check_branch
      %45 = sbr.rel (0) target = $region9
    $region8: #{tpu_custom_call.1} parent=1 // pred_region
      %s47 = ssub.s32 64, 64
      %48 = vsyncadd [#allocation3], %s47
      %s49 = sshll.u32 [#allocation2], 4
      %s50 = int_to_ptr.vmem [resolvable:$true] %s49
      %55 = dma.vmem_to_hbm [thread:$0]  %s50, 64, %s1, [#allocation3], 32, 32, 2
    $region9: #{tpu_custom_call.1} parent=1 // pred_fallthru
      _
    // Predicated region
    $region10: #{tpu_custom_call.1} parent=1 // pred_check
      _
    $region11: #{tpu_custom_call.1} parent=1 // pred_check_branch
      %57 = sbr.rel (0) target = $region13
    $region12: #{tpu_custom_call.1} parent=1 // pred_region
      %58 = dma.done [#allocation3], 64
    $region13: #{tpu_custom_call.1} parent=1 // pred_fallthru
      _
    %59 = vsyncpa [#allocation3], 1

</llo_original>
